<compile_context>
chip_gen: v7x
topology: tpu7x:2x2x1
jax: 0.10.0
libtpu: 0.0.40
codegen_flags: <defaults>
</compile_context>

<pallas_src>
import functools

import jax
import jax.numpy as jnp
from jax.experimental import pallas as pl
from jax.experimental.pallas import tpu as pltpu

_SUB = 128  # matmul sub-block width (lanes)


def _round_up(n, m):
    return ((n + m - 1) // m) * m


def _cumnorm_kernel(tri_ref, x_ref, o_ref, rsum_ref, rpsum_ref, *, eps, T):
    R, Tc = x_ref.shape
    n_sub = Tc // _SUB
    needs_mask = (T % Tc) != 0  # static: only the last time tile can be partial

    t_idx = pl.program_id(1)

    # Reset the per-row running sums at the start of each row-tile's time sweep.
    @pl.when(t_idx == 0)
    def _():
        rsum_ref[...] = jnp.zeros_like(rsum_ref)
        rpsum_ref[...] = jnp.zeros_like(rpsum_ref)

    tri = tri_ref[...]                                           # (128, 128) f32, resident
    lane = jax.lax.broadcasted_iota(jnp.int32, (1, _SUB), 1)     # hoisted out of the loop
    t_base = t_idx * Tc

    carry_s = rsum_ref[...]                                      # (R, 1) f32
    carry_p = rpsum_ref[...]

    for j in range(n_sub):                                       # 1..4 static iterations
        off = t_base + j * _SUB
        col = lane + off                                         # global column index (1, 128)

        xs = x_ref[:, j * _SUB:(j + 1) * _SUB].astype(jnp.float32)
        if needs_mask:
            # Zero out-of-range lanes so garbage in the padded VMEM region of a
            # partial edge block cannot reach valid columns via the matmul.
            xs = jnp.where(col < T, xs, 0.0)

        # Within-sub-block cumulative sums via a (128,128) upper-triangular dot;
        # explicit HIGHEST precision keeps cum_pow_sum f32-exact.
        cs = jnp.dot(xs, tri, preferred_element_type=jnp.float32,
                     precision=jax.lax.Precision.HIGHEST) + carry_s
        ps = jnp.dot(xs * xs, tri, preferred_element_type=jnp.float32,
                     precision=jax.lax.Precision.HIGHEST) + carry_p

        # Carry this sub-block's last column into the next sub-block / tile.
        carry_s = cs[:, _SUB - 1:_SUB]
        carry_p = ps[:, _SUB - 1:_SUB]

        # Stats: exact (1,128) reciprocal of count, rsqrt instead of sqrt+div.
        inv_count = 1.0 / (col + 1).astype(jnp.float32)
        cum_mean = cs * inv_count
        cum_var = ps * inv_count - cum_mean * cum_mean
        inv_std = jax.lax.rsqrt(cum_var + eps)

        o_ref[:, j * _SUB:(j + 1) * _SUB] = ((xs - cum_mean) * inv_std).astype(o_ref.dtype)

    rsum_ref[...] = carry_s
    rpsum_ref[...] = carry_p


def cumulative_normalizer(x, eps=1e-4):
    """x: (B, F, T) array. Returns (B, F, T) cumulatively-normalized along T."""
    B, F, T = x.shape
    rows = B * F
    x2 = x.reshape(rows, T)  # native dtype, no host-side copy/upcast/pad

    # Time tile: lane-dense, up to 512 wide (matmul is sub-blocked at 128).
    Tc = min(512, _round_up(T, _SUB))
    # Row tile: large to amortize per-grid-step overhead, but split into at
    # least 2 tiles when possible so the "parallel" axis uses both v7x cores.
    block_rows = min(512, _round_up(rows, 8))
    if rows > 8:
        block_rows = min(block_rows, _round_up(pl.cdiv(rows, 2), 8))

    grid = (pl.cdiv(rows, block_rows), pl.cdiv(T, Tc))  # time axis last (carried)

    # Upper-triangular ones matrix, built once; same block every step so it
    # stays VMEM-resident (no per-step DMA or iota/compare).
    idx = jnp.arange(_SUB, dtype=jnp.int32)
    tri = (idx[:, None] <= idx[None, :]).astype(jnp.float32)  # (128, 128)

    out = pl.pallas_call(
        functools.partial(_cumnorm_kernel, eps=float(eps), T=T),
        out_shape=jax.ShapeDtypeStruct((rows, T), x.dtype),
        grid=grid,
        in_specs=[
            pl.BlockSpec((_SUB, _SUB), lambda r, t: (0, 0)),        # triangular operand
            pl.BlockSpec((block_rows, Tc), lambda r, t: (r, t)),    # input tile
        ],
        out_specs=pl.BlockSpec((block_rows, Tc), lambda r, t: (r, t)),
        scratch_shapes=[
            pltpu.VMEM((block_rows, 1), jnp.float32),   # running sum
            pltpu.VMEM((block_rows, 1), jnp.float32),   # running sum of squares
        ],
        compiler_params=pltpu.CompilerParams(
            dimension_semantics=("parallel", "arbitrary"),
        ),
    )(tri, x2)

    return out.reshape(B, F, T)


def _reference(x, eps=1e-4):
    x = x.astype(jnp.float32)
    T = x.shape[-1]
    cum_sum = jnp.cumsum(x, axis=-1)
    cum_pow_sum = jnp.cumsum(x * x, axis=-1)
    count = jnp.arange(1, T + 1, dtype=jnp.float32).reshape(1, 1, T)
    cum_mean = cum_sum / count
    cum_var = cum_pow_sum / count - cum_mean ** 2
    cum_std = jnp.sqrt(cum_var + eps)
    return (x - cum_mean) / cum_std


if __name__ == "__main__":
    key = jax.random.PRNGKey(0)

    # Small shape consistent with the module's (batch, features, time) input.
    B, F, T = 2, 4, 16
    x = jax.random.normal(key, (B, F, T), dtype=jnp.float32)
    out = jax.block_until_ready(cumulative_normalizer(x, eps=1e-4))
    ref = _reference(x, eps=1e-4)
    assert out.shape == (B, F, T)
    assert jnp.allclose(out, ref, atol=1e-5, rtol=1e-5), (
        f"max abs err {jnp.max(jnp.abs(out - ref))}")

    # Second check: exercises multiple row tiles, the multi-time-tile carry
    # path and the partial last time tile (T=700 -> tiles of 512 + 188 valid).
    key2 = jax.random.PRNGKey(1)
    x_big = jax.random.normal(key2, (2, 8, 700), dtype=jnp.float32)
    out_big = jax.block_until_ready(cumulative_normalizer(x_big, eps=1e-4))
    ref_big = _reference(x_big, eps=1e-4)
    assert jnp.allclose(out_big, ref_big, atol=1e-4, rtol=1e-4), (
        f"max abs err {jnp.max(jnp.abs(out_big - ref_big))}")

    print("KERNEL_OK")
</pallas_src>

<mosaic_0001>
module attributes {stable_mosaic.version = 11 : i64} {
  func.func @_cumnorm_kernel(%arg0: i32, %arg1: i32, %arg2: memref<128x128xf32, #tpu.memory_space<vmem>>, %arg3: memref<8x128xf32, #tpu.memory_space<vmem>>, %arg4: memref<8x128xf32, #tpu.memory_space<vmem>>, %arg5: memref<8x1xf32, #tpu.memory_space<vmem>>, %arg6: memref<8x1xf32, #tpu.memory_space<vmem>>) attributes {dimension_semantics = [#tpu.dimension_semantics<parallel>, #tpu.dimension_semantics<arbitrary>], iteration_bounds = array<i64: 1, 1>, scalar_prefetch = 0 : i64, scratch_operands = 2 : i64, tpu.core_type = #tpu.core_type<tc>, window_params = [{pipeline_mode = #tpu.pipeline_mode<synchronous>, transform_indices = @transform_0, window_bounds = array<i64: 128, 128>}, {transform_indices = @transform_1, window_bounds = array<i64: 8, 128>}, {transform_indices = @transform_2, window_bounds = array<i64: 8, 128>}]} {
    %c0_i32 = arith.constant 0 : i32
    %0 = arith.cmpi eq, %arg1, %c0_i32 : i32
    %1 = arith.extui %0 : i1 to i32
    %c0_i32_0 = arith.constant 0 : i32
    %2 = arith.cmpi ne, %1, %c0_i32_0 : i32
    scf.if %2 {
      %cst_19 = arith.constant 0.000000e+00 : f32
      %46 = vector.broadcast %cst_19 : f32 to vector<8x1xf32>
      %c0_20 = arith.constant 0 : index
      %c0_21 = arith.constant 0 : index
      %47 = vector.load %arg5[%c0_20, %c0_21] : memref<8x1xf32, #tpu.memory_space<vmem>>, vector<8x1xf32>
      tpu.vector_store %arg5[%c0_20, %c0_21], %46 {strides = array<i32>} : memref<8x1xf32, #tpu.memory_space<vmem>>, vector<8x1xf32>,
      %cst_22 = arith.constant 0.000000e+00 : f32
      %48 = vector.broadcast %cst_22 : f32 to vector<8x1xf32>
      %c0_23 = arith.constant 0 : index
      %c0_24 = arith.constant 0 : index
      %49 = vector.load %arg6[%c0_23, %c0_24] : memref<8x1xf32, #tpu.memory_space<vmem>>, vector<8x1xf32>
      tpu.vector_store %arg6[%c0_23, %c0_24], %48 {strides = array<i32>} : memref<8x1xf32, #tpu.memory_space<vmem>>, vector<8x1xf32>,
    } else {
    }
    %c0 = arith.constant 0 : index
    %c0_1 = arith.constant 0 : index
    %3 = vector.load %arg2[%c0, %c0_1] : memref<128x128xf32, #tpu.memory_space<vmem>>, vector<128x128xf32>
    %4 = tpu.iota {dimensions = array<i32: 1>} : vector<1x128xi32>
    %c128_i32 = arith.constant 128 : i32
    %5 = arith.muli %arg1, %c128_i32 : i32
    %c0_2 = arith.constant 0 : index
    %c0_3 = arith.constant 0 : index
    %6 = vector.load %arg5[%c0_2, %c0_3] : memref<8x1xf32, #tpu.memory_space<vmem>>, vector<8x1xf32>
    %c0_4 = arith.constant 0 : index
    %c0_5 = arith.constant 0 : index
    %7 = vector.load %arg6[%c0_4, %c0_5] : memref<8x1xf32, #tpu.memory_space<vmem>>, vector<8x1xf32>
    %c0_i32_6 = arith.constant 0 : i32
    %8 = arith.addi %5, %c0_i32_6 : i32
    %9 = vector.broadcast %8 : i32 to vector<1x128xi32>
    %10 = arith.addi %4, %9 : vector<1x128xi32>
    %c0_7 = arith.constant 0 : index
    %c0_8 = arith.constant 0 : index
    %11 = vector.load %arg3[%c0_7, %c0_8] : memref<8x128xf32, #tpu.memory_space<vmem>>, vector<8x128xf32>
    %c16_i32 = arith.constant 16 : i32
    %12 = vector.broadcast %c16_i32 : i32 to vector<1x128xi32>
    %13 = arith.cmpi slt, %10, %12 : vector<1x128xi32>
    %cst = arith.constant 0.000000e+00 : f32
    %14 = vector.shape_cast %13 : vector<1x128xi1> to vector<1x128xi1>
    %15 = vector.broadcast %14 : vector<1x128xi1> to vector<8x128xi1>
    %16 = vector.broadcast %cst : f32 to vector<8x128xf32>
    %17 = arith.select %15, %11, %16 : vector<8x128xi1>, vector<8x128xf32>
    %cst_9 = arith.constant dense<0.000000e+00> : vector<8x128xf32>
    %18 = tpu.matmul %17, %3, %cst_9 {dimension_numbers = #tpu.dot_dimension_numbers<[1], [0], [0], [1], [0, 0, 1, 1], [], []>, precision = #tpu.contract_precision<fp32>} : vector<8x128xf32>, vector<128x128xf32>, vector<8x128xf32> -> vector<8x128xf32>
    %19 = vector.broadcast %6 : vector<8x1xf32> to vector<8x128xf32>
    %20 = arith.addf %18, %19 : vector<8x128xf32>
    %21 = arith.mulf %17, %17 : vector<8x128xf32>
    %cst_10 = arith.constant dense<0.000000e+00> : vector<8x128xf32>
    %22 = tpu.matmul %21, %3, %cst_10 {dimension_numbers = #tpu.dot_dimension_numbers<[1], [0], [0], [1], [0, 0, 1, 1], [], []>, precision = #tpu.contract_precision<fp32>} : vector<8x128xf32>, vector<128x128xf32>, vector<8x128xf32> -> vector<8x128xf32>
    %23 = vector.broadcast %7 : vector<8x1xf32> to vector<8x128xf32>
    %24 = arith.addf %22, %23 : vector<8x128xf32>
    %25 = vector.extract_strided_slice %20 {offsets = [0, 127], sizes = [8, 1], strides = [1, 1]} : vector<8x128xf32> to vector<8x1xf32>
    %26 = vector.extract_strided_slice %24 {offsets = [0, 127], sizes = [8, 1], strides = [1, 1]} : vector<8x128xf32> to vector<8x1xf32>
    %c1_i32 = arith.constant 1 : i32
    %27 = vector.broadcast %c1_i32 : i32 to vector<1x128xi32>
    %28 = arith.addi %10, %27 : vector<1x128xi32>
    %29 = arith.sitofp %28 : vector<1x128xi32> to vector<1x128xf32>
    %cst_11 = arith.constant 1.000000e+00 : f32
    %30 = vector.broadcast %cst_11 : f32 to vector<1x128xf32>
    %31 = arith.divf %30, %29 : vector<1x128xf32>
    %32 = vector.broadcast %31 : vector<1x128xf32> to vector<8x128xf32>
    %33 = arith.mulf %20, %32 : vector<8x128xf32>
    %34 = vector.broadcast %31 : vector<1x128xf32> to vector<8x128xf32>
    %35 = arith.mulf %24, %34 : vector<8x128xf32>
    %36 = arith.mulf %33, %33 : vector<8x128xf32>
    %37 = arith.subf %35, %36 : vector<8x128xf32>
    %cst_12 = arith.constant 9.99999974E-5 : f32
    %38 = vector.broadcast %cst_12 : f32 to vector<8x128xf32>
    %39 = arith.addf %37, %38 : vector<8x128xf32>
    %40 = math.rsqrt %39 : vector<8x128xf32>
    %41 = arith.subf %17, %33 : vector<8x128xf32>
    %42 = arith.mulf %41, %40 : vector<8x128xf32>
    %c0_13 = arith.constant 0 : index
    %c0_14 = arith.constant 0 : index
    %43 = vector.load %arg4[%c0_13, %c0_14] : memref<8x128xf32, #tpu.memory_space<vmem>>, vector<8x128xf32>
    tpu.vector_store %arg4[%c0_13, %c0_14], %42 {strides = array<i32>} : memref<8x128xf32, #tpu.memory_space<vmem>>, vector<8x128xf32>,
    %c0_15 = arith.constant 0 : index
    %c0_16 = arith.constant 0 : index
    %44 = vector.load %arg5[%c0_15, %c0_16] : memref<8x1xf32, #tpu.memory_space<vmem>>, vector<8x1xf32>
    tpu.vector_store %arg5[%c0_15, %c0_16], %25 {strides = array<i32>} : memref<8x1xf32, #tpu.memory_space<vmem>>, vector<8x1xf32>,
    %c0_17 = arith.constant 0 : index
    %c0_18 = arith.constant 0 : index
    %45 = vector.load %arg6[%c0_17, %c0_18] : memref<8x1xf32, #tpu.memory_space<vmem>>, vector<8x1xf32>
    tpu.vector_store %arg6[%c0_17, %c0_18], %26 {strides = array<i32>} : memref<8x1xf32, #tpu.memory_space<vmem>>, vector<8x1xf32>,
    return
  }
  func.func @transform_0(%arg0: i32, %arg1: i32) -> (i32, i32) {
    %c0_i32 = arith.constant 0 : i32
    %c0_i32_0 = arith.constant 0 : i32
    %c0_i32_1 = arith.constant 0 : i32
    return %c0_i32, %c0_i32_0 : i32, i32
  }
  func.func @transform_1(%arg0: i32, %arg1: i32) -> (i32, i32) {
    %c0_i32 = arith.constant 0 : i32
    return %arg0, %arg1 : i32, i32
  }
  func.func @transform_2(%arg0: i32, %arg1: i32) -> (i32, i32) {
    %c0_i32 = arith.constant 0 : i32
    return %arg0, %arg1 : i32, i32
  }
}

</mosaic_0001>

<llo_original>
// kernel: tpu_custom_call.1
$region0: #{tpu_custom_call.1}
  #allocation0 [shape = 'u32[]', space=smem, size = 0x4, offset = 0x4, fixed_abs, tag = 'smem constant byte address 0x4 - core index']
  #allocation1 [shape = 'u32[144,128]{1,0:T(1,128)}', space=vmem, size = 0x12000, scoped, tag = 'internal scratch']
  #allocation2 [shape = 'f32[8,1]{1,0:T(8,128)}', space=vmem, size = 0x1000, scoped, tag = 'scratch operand']
  #allocation3 [shape = 'f32[8,1]{1,0:T(8,128)}', space=vmem, size = 0x1000, scoped, tag = 'scratch operand']
  %s0 = inlined_call_operand.hbm [shape: f32[128,128], index: 0, kind: input, shape index: {}]
  %s1 = inlined_call_operand.hbm [shape: f32[8,16], index: 1, kind: input, shape index: {}]
  %s2 = inlined_call_operand.hbm [shape: f32[8,16], index: 2, kind: output, shape index: {}]
  %s3 = sld [smem:[#allocation0]]
  $region30: #{tpu_custom_call.1} parent=0
    _
  %s5 = ssub.s32 1, %s3
  %s6 = scalar_select 0, %s5, %s3
  $region1: #{tpu_custom_call.1} parent=0
    #allocation4 [shape = 'u8[65536]{0}', space=vmem, size = 0x10000, scoped, tag = 'input window, operand 0, single buffered']
    #allocation5 [shape = 's32[1]{0}', space=sflag, size = 0x4, scoped, tag = 'scoped memory for tpu_custom_call.1']
    #allocation6 [shape = 's32[1]{0}', space=sflag, size = 0x4, scoped, tag = 'scoped memory for tpu_custom_call.1']
    #allocation7 [shape = 'u8[4096]{0}', space=vmem, size = 0x1000, scoped, tag = 'input window, operand 1, single buffered']
    #allocation8 [shape = 's32[1]{0}', space=sflag, size = 0x4, scoped, tag = 'scoped memory for tpu_custom_call.1']
    #allocation9 [shape = 'u8[4096]{0}', space=vmem, size = 0x1000, scoped, tag = 'output window, operand 0, single buffered']
    %7 = vsyncpa [#allocation5], 0
    %8 = vsyncpa [#allocation8], 0
    %9 = vsyncpa [#allocation6], 0
    // Predicated region
    $region2: #{tpu_custom_call.1} parent=1 // pred_check
      _
    $region3: #{tpu_custom_call.1} parent=1 // pred_check_branch
      %11 = sbr.rel (0) target = $region5
    $region4: #{tpu_custom_call.1} parent=1 // pred_region
      %s13 = ssub.s32 2048, 2048
      %14 = vsyncadd [#allocation5], %s13
      %s15 = sshll.u32 [#allocation4], 4
      %s16 = int_to_ptr.vmem [resolvable:$true] %s15
      %21 = dma.hbm_to_vmem [thread:$0]  %s0, 2048, %s16, [#allocation5], 128, 128, 8
    $region5: #{tpu_custom_call.1} parent=1 // pred_fallthru
      _
    // Predicated region
    $region6: #{tpu_custom_call.1} parent=1 // pred_check
      _
    $region7: #{tpu_custom_call.1} parent=1 // pred_check_branch
      %23 = sbr.rel (0) target = $region9
    $region8: #{tpu_custom_call.1} parent=1 // pred_region
      %s25 = ssub.s32 128, 128
      %26 = vsyncadd [#allocation8], %s25
      %s28 = sshll.u32 [#allocation7], 4
      %s29 = int_to_ptr.vmem [resolvable:$true] %s28
      %31 = dma.hbm_to_vmem [thread:$0]  %s1, 128, %s29, [#allocation8]
    $region9: #{tpu_custom_call.1} parent=1 // pred_fallthru
      _
    // Predicated region
    $region10: #{tpu_custom_call.1} parent=1 // pred_check
      _
    $region11: #{tpu_custom_call.1} parent=1 // pred_check_branch
      %33 = sbr.rel (0) target = $region13
    $region12: #{tpu_custom_call.1} parent=1 // pred_region
      %34 = dma.done [#allocation5], 2048
    $region13: #{tpu_custom_call.1} parent=1 // pred_fallthru
      _
    // Predicated region
    $region14: #{tpu_custom_call.1} parent=1 // pred_check
      _
    $region15: #{tpu_custom_call.1} parent=1 // pred_check_branch
      %36 = sbr.rel (0) target = $region17
    $region16: #{tpu_custom_call.1} parent=1 // pred_region
      %37 = dma.done [#allocation8], 128
    $region17: #{tpu_custom_call.1} parent=1 // pred_fallthru
      _
    %p38 = scmp.eq.s32.totalorder 0, 0
    // Predicated region
    $region18: #{tpu_custom_call.1} parent=1 // pred_check
      %p39 = pneg %p38
    $region19: #{tpu_custom_call.1} parent=1 // pred_check_branch
      %41 = sbr.rel (%p39) target = $region21
    $region20: #{tpu_custom_call.1} parent=1 // pred_region
      %vm42 = vcmask 7168
      %43 = vst.msk [vmem:[#allocation2] sm:$0xff] %vm42, 0.0
      %44 = vst.msk [vmem:[#allocation3] sm:$0xff] %vm42, 0.0
    $region21: #{tpu_custom_call.1} parent=1 // pred_fallthru
      _
    %v45 = vld [vmem:[#allocation4] sm:$0xff]
    %v46 = vld [vmem:[#allocation4 + $0x8] sm:$0xff]
    %v47 = vld [vmem:[#allocation4 + $0x10] sm:$0xff]
    %v48 = vld [vmem:[#allocation4 + $0x18] sm:$0xff]
    %v49 = vld [vmem:[#allocation4 + $0x20] sm:$0xff]
    %v50 = vld [vmem:[#allocation4 + $0x28] sm:$0xff]
    %v51 = vld [vmem:[#allocation4 + $0x30] sm:$0xff]
    %v52 = vld [vmem:[#allocation4 + $0x38] sm:$0xff]
    %v53 = vld [vmem:[#allocation4 + $0x40] sm:$0xff]
    %v54 = vld [vmem:[#allocation4 + $0x48] sm:$0xff]
    %v55 = vld [vmem:[#allocation4 + $0x50] sm:$0xff]
    %v56 = vld [vmem:[#allocation4 + $0x58] sm:$0xff]
    %v57 = vld [vmem:[#allocation4 + $0x60] sm:$0xff]
    %v58 = vld [vmem:[#allocation4 + $0x68] sm:$0xff]
    %v59 = vld [vmem:[#allocation4 + $0x70] sm:$0xff]
    %v60 = vld [vmem:[#allocation4 + $0x78] sm:$0xff]
    %v61 = vlaneseq
    %v62 = vand.u32 %v61, 127
    %s63 = smul.u32 0, 128
    %v64 = vld [vmem:[#allocation2] sm:$0xff]
    %v65 = vld [vmem:[#allocation3] sm:$0xff]
    %v66 = vstv %s63
    %v67 = vadd.s32 %v62, %v66
    %v68 = vld [vmem:[#allocation7] sm:$0xff]
    %vm69 = vcmp.lt.s32.totalorder %v67, 16
    %v70 = vsel %vm69, 1, 0
    %vm71 = vcmp.eq.s32.totalorder %v70, 1
    %v72 = vsel %vm71, %v68, 0.0
    %74 = vset.pattern.permute.xlu0 0
    %75 = vperm.xlu0 %74, %v64
    %v76 = vpop.permute.xlu0 %75
    %78 = vmatprep.subr.mxu0 0.0
    %v79 = vand.u32 %v45, 4294901760
    %80 = vmatpush1.msra.mxu0 %v79
    %81 = vmatprep.subr.mxu0 0.0
    %v82 = vand.u32 %v46, 4294901760
    %83 = vmatpush1.msra.mxu0 %v82
    %84 = vmatprep.subr.mxu0 0.0
    %v85 = vand.u32 %v47, 4294901760
    %86 = vmatpush1.msra.mxu0 %v85
    %87 = vmatprep.subr.mxu0 0.0
    %v88 = vand.u32 %v48, 4294901760
    %89 = vmatpush1.msra.mxu0 %v88
    %90 = vmatprep.subr.mxu0 0.0
    %v91 = vand.u32 %v49, 4294901760
    %92 = vmatpush1.msra.mxu0 %v91
    %93 = vmatprep.subr.mxu0 0.0
    %v94 = vand.u32 %v50, 4294901760
    %95 = vmatpush1.msra.mxu0 %v94
    %96 = vmatprep.subr.mxu0 0.0
    %v97 = vand.u32 %v51, 4294901760
    %98 = vmatpush1.msra.mxu0 %v97
    %99 = vmatprep.subr.mxu0 0.0
    %v100 = vand.u32 %v52, 4294901760
    %101 = vmatpush1.msra.mxu0 %v100
    %102 = vmatprep.subr.mxu0 0.0
    %v103 = vand.u32 %v53, 4294901760
    %104 = vmatpush1.msra.mxu0 %v103
    %105 = vmatprep.subr.mxu0 0.0
    %v106 = vand.u32 %v54, 4294901760
    %107 = vmatpush1.msra.mxu0 %v106
    %108 = vmatprep.subr.mxu0 0.0
    %v109 = vand.u32 %v55, 4294901760
    %110 = vmatpush1.msra.mxu0 %v109
    %111 = vmatprep.subr.mxu0 0.0
    %v112 = vand.u32 %v56, 4294901760
    %113 = vmatpush1.msra.mxu0 %v112
    %114 = vmatprep.subr.mxu0 0.0
    %v115 = vand.u32 %v57, 4294901760
    %116 = vmatpush1.msra.mxu0 %v115
    %117 = vmatprep.subr.mxu0 0.0
    %v118 = vand.u32 %v58, 4294901760
    %119 = vmatpush1.msra.mxu0 %v118
    %120 = vmatprep.subr.mxu0 0.0
    %v121 = vand.u32 %v59, 4294901760
    %122 = vmatpush1.msra.mxu0 %v121
    %123 = vmatprep.subr.mxu0 0.0
    %v124 = vand.u32 %v60, 4294901760
    %125 = vmatpush1.msra.mxu0 %v124
    %126 = vmatprep.subr.mxu0 0.0
    %127 = vmatpush1.msra.mxu0 0.0
    %128 = vmatprep.subr.mxu0 0.0
    %129 = vmatpush1.msra.mxu0 0.0
    %130 = vmatprep.subr.mxu0 0.0
    %131 = vmatpush1.msra.mxu0 0.0
    %132 = vmatprep.subr.mxu0 0.0
    %133 = vmatpush1.msra.mxu0 0.0
    %134 = vmatprep.subr.mxu0 0.0
    %135 = vmatpush1.msra.mxu0 0.0
    %136 = vmatprep.subr.mxu0 0.0
    %137 = vmatpush1.msra.mxu0 0.0
    %138 = vmatprep.subr.mxu0 0.0
    %139 = vmatpush1.msra.mxu0 0.0
    %140 = vmatprep.subr.mxu0 0.0
    %141 = vmatpush1.msra.mxu0 0.0
    %142 = vmatprep.subr.mxu0 0.0
    %143 = vmatpush1.msra.mxu0 0.0
    %144 = vmatprep.subr.mxu0 0.0
    %145 = vmatpush1.msra.mxu0 0.0
    %146 = vmatprep.subr.mxu0 0.0
    %147 = vmatpush1.msra.mxu0 0.0
    %148 = vmatprep.subr.mxu0 0.0
    %149 = vmatpush1.msra.mxu0 0.0
    %150 = vmatprep.subr.mxu0 0.0
    %151 = vmatpush1.msra.mxu0 0.0
    %152 = vmatprep.subr.mxu0 0.0
    %153 = vmatpush1.msra.mxu0 0.0
    %154 = vmatprep.subr.mxu0 0.0
    %155 = vmatpush1.msra.mxu0 0.0
    %156 = vmatprep.subr.mxu0 0.0
    %157 = vmatpush1.msra.mxu0 0.0
    %158 = vmatprep.mubr.f32.mxu0 0.0
    %v159 = vand.u32 %v72, 4294901760
    %v160 = vsub.f32 %v72, %v159
    %v161 = vand.u32 %v160, 4294901760
    %v162 = vsub.f32 %v160, %v161
    %v163 = vand.u32 %v162, 4294901760
    %164 = vmatmul.mubr.f32.gmra.mrb[0].mxu0 %v163
    %v165 = vpop.f32.mrb[0].mxu0
    %v166 = vadd.f32 %v76, %v165
    %v167 = vpop.f32.mrb[0].mxu0
    %168 = vdwg.mxu0
    %169 = vmatprep.subr.mxu0 0.0
    %v170 = vand.u32 %v45, 4294901760
    %v171 = vsub.f32 %v45, %v170
    %v172 = vand.u32 %v171, 4294901760
    %v173 = vsub.f32 %v171, %v172
    %v174 = vand.u32 %v173, 4294901760
    %175 = vmatpush1.msra.mxu0 %v174
    %176 = vmatprep.subr.mxu0 0.0
    %v177 = vand.u32 %v46, 4294901760
    %v178 = vsub.f32 %v46, %v177
    %v179 = vand.u32 %v178, 4294901760
    %v180 = vsub.f32 %v178, %v179
    %v181 = vand.u32 %v180, 4294901760
    %182 = vmatpush1.msra.mxu0 %v181
    %183 = vmatprep.subr.mxu0 0.0
    %v184 = vand.u32 %v47, 4294901760
    %v185 = vsub.f32 %v47, %v184
    %v186 = vand.u32 %v185, 4294901760
    %v187 = vsub.f32 %v185, %v186
    %v188 = vand.u32 %v187, 4294901760
    %189 = vmatpush1.msra.mxu0 %v188
    %190 = vmatprep.subr.mxu0 0.0
    %v191 = vand.u32 %v48, 4294901760
    %v192 = vsub.f32 %v48, %v191
    %v193 = vand.u32 %v192, 4294901760
    %v194 = vsub.f32 %v192, %v193
    %v195 = vand.u32 %v194, 4294901760
    %196 = vmatpush1.msra.mxu0 %v195
    %197 = vmatprep.subr.mxu0 0.0
    %v198 = vand.u32 %v49, 4294901760
    %v199 = vsub.f32 %v49, %v198
    %v200 = vand.u32 %v199, 4294901760
    %v201 = vsub.f32 %v199, %v200
    %v202 = vand.u32 %v201, 4294901760
    %203 = vmatpush1.msra.mxu0 %v202
    %204 = vmatprep.subr.mxu0 0.0
    %v205 = vand.u32 %v50, 4294901760
    %v206 = vsub.f32 %v50, %v205
    %v207 = vand.u32 %v206, 4294901760
    %v208 = vsub.f32 %v206, %v207
    %v209 = vand.u32 %v208, 4294901760
    %210 = vmatpush1.msra.mxu0 %v209
    %211 = vmatprep.subr.mxu0 0.0
    %v212 = vand.u32 %v51, 4294901760
    %v213 = vsub.f32 %v51, %v212
    %v214 = vand.u32 %v213, 4294901760
    %v215 = vsub.f32 %v213, %v214
    %v216 = vand.u32 %v215, 4294901760
    %217 = vmatpush1.msra.mxu0 %v216
    %218 = vmatprep.subr.mxu0 0.0
    %v219 = vand.u32 %v52, 4294901760
    %v220 = vsub.f32 %v52, %v219
    %v221 = vand.u32 %v220, 4294901760
    %v222 = vsub.f32 %v220, %v221
    %v223 = vand.u32 %v222, 4294901760
    %224 = vmatpush1.msra.mxu0 %v223
    %225 = vmatprep.subr.mxu0 0.0
    %v226 = vand.u32 %v53, 4294901760
    %v227 = vsub.f32 %v53, %v226
    %v228 = vand.u32 %v227, 4294901760
    %v229 = vsub.f32 %v227, %v228
    %v230 = vand.u32 %v229, 4294901760
    %231 = vmatpush1.msra.mxu0 %v230
    %232 = vmatprep.subr.mxu0 0.0
    %v233 = vand.u32 %v54, 4294901760
    %v234 = vsub.f32 %v54, %v233
    %v235 = vand.u32 %v234, 4294901760
    %v236 = vsub.f32 %v234, %v235
    %v237 = vand.u32 %v236, 4294901760
    %238 = vmatpush1.msra.mxu0 %v237
    %239 = vmatprep.subr.mxu0 0.0
    %v240 = vand.u32 %v55, 4294901760
    %v241 = vsub.f32 %v55, %v240
    %v242 = vand.u32 %v241, 4294901760
    %v243 = vsub.f32 %v241, %v242
    %v244 = vand.u32 %v243, 4294901760
    %245 = vmatpush1.msra.mxu0 %v244
    %246 = vmatprep.subr.mxu0 0.0
    %v247 = vand.u32 %v56, 4294901760
    %v248 = vsub.f32 %v56, %v247
    %v249 = vand.u32 %v248, 4294901760
    %v250 = vsub.f32 %v248, %v249
    %v251 = vand.u32 %v250, 4294901760
    %252 = vmatpush1.msra.mxu0 %v251
    %253 = vmatprep.subr.mxu0 0.0
    %v254 = vand.u32 %v57, 4294901760
    %v255 = vsub.f32 %v57, %v254
    %v256 = vand.u32 %v255, 4294901760
    %v257 = vsub.f32 %v255, %v256
    %v258 = vand.u32 %v257, 4294901760
    %259 = vmatpush1.msra.mxu0 %v258
    %260 = vmatprep.subr.mxu0 0.0
    %v261 = vand.u32 %v58, 4294901760
    %v262 = vsub.f32 %v58, %v261
    %v263 = vand.u32 %v262, 4294901760
    %v264 = vsub.f32 %v262, %v263
    %v265 = vand.u32 %v264, 4294901760
    %266 = vmatpush1.msra.mxu0 %v265
    %267 = vmatprep.subr.mxu0 0.0
    %v268 = vand.u32 %v59, 4294901760
    %v269 = vsub.f32 %v59, %v268
    %v270 = vand.u32 %v269, 4294901760
    %v271 = vsub.f32 %v269, %v270
    %v272 = vand.u32 %v271, 4294901760
    %273 = vmatpush1.msra.mxu0 %v272
    %274 = vmatprep.subr.mxu0 0.0
    %v275 = vand.u32 %v60, 4294901760
    %v276 = vsub.f32 %v60, %v275
    %v277 = vand.u32 %v276, 4294901760
    %v278 = vsub.f32 %v276, %v277
    %v279 = vand.u32 %v278, 4294901760
    %280 = vmatpush1.msra.mxu0 %v279
    %281 = vmatprep.subr.mxu0 0.0
    %282 = vmatpush1.msra.mxu0 0.0
    %283 = vmatprep.subr.mxu0 0.0
    %284 = vmatpush1.msra.mxu0 0.0
    %285 = vmatprep.subr.mxu0 0.0
    %286 = vmatpush1.msra.mxu0 0.0
    %287 = vmatprep.subr.mxu0 0.0
    %288 = vmatpush1.msra.mxu0 0.0
    %289 = vmatprep.subr.mxu0 0.0
    %290 = vmatpush1.msra.mxu0 0.0
    %291 = vmatprep.subr.mxu0 0.0
    %292 = vmatpush1.msra.mxu0 0.0
    %293 = vmatprep.subr.mxu0 0.0
    %294 = vmatpush1.msra.mxu0 0.0
    %295 = vmatprep.subr.mxu0 0.0
    %296 = vmatpush1.msra.mxu0 0.0
    %297 = vmatprep.subr.mxu0 0.0
    %298 = vmatpush1.msra.mxu0 0.0
    %299 = vmatprep.subr.mxu0 0.0
    %300 = vmatpush1.msra.mxu0 0.0
    %301 = vmatprep.subr.mxu0 0.0
    %302 = vmatpush1.msra.mxu0 0.0
    %303 = vmatprep.subr.mxu0 0.0
    %304 = vmatpush1.msra.mxu0 0.0
    %305 = vmatprep.subr.mxu0 0.0
    %306 = vmatpush1.msra.mxu0 0.0
    %307 = vmatprep.subr.mxu0 0.0
    %308 = vmatpush1.msra.mxu0 0.0
    %309 = vmatprep.subr.mxu0 0.0
    %310 = vmatpush1.msra.mxu0 0.0
    %311 = vmatprep.subr.mxu0 0.0
    %312 = vmatpush1.msra.mxu0 0.0
    %313 = vmatprep.mubr.f32.mxu0 0.0
    %v314 = vand.u32 %v72, 4294901760
    %315 = vmatmul.mubr.f32.gmra.mrb[0].mxu0 %v314
    %v316 = vpop.f32.mrb[0].mxu0
    %v317 = vadd.f32 %v166, %v316
    %v318 = vpop.f32.mrb[0].mxu0
    %319 = vdwg.mxu0
    %320 = vmatprep.subr.mxu0 0.0
    %v321 = vand.u32 %v45, 4294901760
    %v322 = vsub.f32 %v45, %v321
    %323 = vmatpush1.msra.mxu0 %v322
    %324 = vmatprep.subr.mxu0 0.0
    %v325 = vand.u32 %v46, 4294901760
    %v326 = vsub.f32 %v46, %v325
    %327 = vmatpush1.msra.mxu0 %v326
    %328 = vmatprep.subr.mxu0 0.0
    %v329 = vand.u32 %v47, 4294901760
    %v330 = vsub.f32 %v47, %v329
    %331 = vmatpush1.msra.mxu0 %v330
    %332 = vmatprep.subr.mxu0 0.0
    %v333 = vand.u32 %v48, 4294901760
    %v334 = vsub.f32 %v48, %v333
    %335 = vmatpush1.msra.mxu0 %v334
    %336 = vmatprep.subr.mxu0 0.0
    %v337 = vand.u32 %v49, 4294901760
    %v338 = vsub.f32 %v49, %v337
    %339 = vmatpush1.msra.mxu0 %v338
    %340 = vmatprep.subr.mxu0 0.0
    %v341 = vand.u32 %v50, 4294901760
    %v342 = vsub.f32 %v50, %v341
    %343 = vmatpush1.msra.mxu0 %v342
    %344 = vmatprep.subr.mxu0 0.0
    %v345 = vand.u32 %v51, 4294901760
    %v346 = vsub.f32 %v51, %v345
    %347 = vmatpush1.msra.mxu0 %v346
    %348 = vmatprep.subr.mxu0 0.0
    %v349 = vand.u32 %v52, 4294901760
    %v350 = vsub.f32 %v52, %v349
    %351 = vmatpush1.msra.mxu0 %v350
    %352 = vmatprep.subr.mxu0 0.0
    %v353 = vand.u32 %v53, 4294901760
    %v354 = vsub.f32 %v53, %v353
    %355 = vmatpush1.msra.mxu0 %v354
    %356 = vmatprep.subr.mxu0 0.0
    %v357 = vand.u32 %v54, 4294901760
    %v358 = vsub.f32 %v54, %v357
    %359 = vmatpush1.msra.mxu0 %v358
    %360 = vmatprep.subr.mxu0 0.0
    %v361 = vand.u32 %v55, 4294901760
    %v362 = vsub.f32 %v55, %v361
    %363 = vmatpush1.msra.mxu0 %v362
    %364 = vmatprep.subr.mxu0 0.0
    %v365 = vand.u32 %v56, 4294901760
    %v366 = vsub.f32 %v56, %v365
    %367 = vmatpush1.msra.mxu0 %v366
    %368 = vmatprep.subr.mxu0 0.0
    %v369 = vand.u32 %v57, 4294901760
    %v370 = vsub.f32 %v57, %v369
    %371 = vmatpush1.msra.mxu0 %v370
    %372 = vmatprep.subr.mxu0 0.0
    %v373 = vand.u32 %v58, 4294901760
    %v374 = vsub.f32 %v58, %v373
    %375 = vmatpush1.msra.mxu0 %v374
    %376 = vmatprep.subr.mxu0 0.0
    %v377 = vand.u32 %v59, 4294901760
    %v378 = vsub.f32 %v59, %v377
    %379 = vmatpush1.msra.mxu0 %v378
    %380 = vmatprep.subr.mxu0 0.0
    %v381 = vand.u32 %v60, 4294901760
    %v382 = vsub.f32 %v60, %v381
    %383 = vmatpush1.msra.mxu0 %v382
    %384 = vmatprep.subr.mxu0 0.0
    %385 = vmatpush1.msra.mxu0 0.0
    %386 = vmatprep.subr.mxu0 0.0
    %387 = vmatpush1.msra.mxu0 0.0
    %388 = vmatprep.subr.mxu0 0.0
    %389 = vmatpush1.msra.mxu0 0.0
    %390 = vmatprep.subr.mxu0 0.0
    %391 = vmatpush1.msra.mxu0 0.0
    %392 = vmatprep.subr.mxu0 0.0
    %393 = vmatpush1.msra.mxu0 0.0
    %394 = vmatprep.subr.mxu0 0.0
    %395 = vmatpush1.msra.mxu0 0.0
    %396 = vmatprep.subr.mxu0 0.0
    %397 = vmatpush1.msra.mxu0 0.0
    %398 = vmatprep.subr.mxu0 0.0
    %399 = vmatpush1.msra.mxu0 0.0
    %400 = vmatprep.subr.mxu0 0.0
    %401 = vmatpush1.msra.mxu0 0.0
    %402 = vmatprep.subr.mxu0 0.0
    %403 = vmatpush1.msra.mxu0 0.0
    %404 = vmatprep.subr.mxu0 0.0
    %405 = vmatpush1.msra.mxu0 0.0
    %406 = vmatprep.subr.mxu0 0.0
    %407 = vmatpush1.msra.mxu0 0.0
    %408 = vmatprep.subr.mxu0 0.0
    %409 = vmatpush1.msra.mxu0 0.0
    %410 = vmatprep.subr.mxu0 0.0
    %411 = vmatpush1.msra.mxu0 0.0
    %412 = vmatprep.subr.mxu0 0.0
    %413 = vmatpush1.msra.mxu0 0.0
    %414 = vmatprep.subr.mxu0 0.0
    %415 = vmatpush1.msra.mxu0 0.0
    %416 = vmatprep.mubr.f32.mxu0 0.0
    %v417 = vand.u32 %v72, 4294901760
    %v418 = vsub.f32 %v72, %v417
    %419 = vmatmul.mubr.f32.gmra.mrb[0].mxu0 %v418
    %v420 = vpop.f32.mrb[0].mxu0
    %v421 = vadd.f32 %v317, %v420
    %v422 = vpop.f32.mrb[0].mxu0
    %423 = vdwg.mxu0
    %424 = vmatprep.subr.mxu0 0.0
    %v425 = vand.u32 %v45, 4294901760
    %426 = vmatpush1.msra.mxu0 %v425
    %427 = vmatprep.subr.mxu0 0.0
    %v428 = vand.u32 %v46, 4294901760
    %429 = vmatpush1.msra.mxu0 %v428
    %430 = vmatprep.subr.mxu0 0.0
    %v431 = vand.u32 %v47, 4294901760
    %432 = vmatpush1.msra.mxu0 %v431
    %433 = vmatprep.subr.mxu0 0.0
    %v434 = vand.u32 %v48, 4294901760
    %435 = vmatpush1.msra.mxu0 %v434
    %436 = vmatprep.subr.mxu0 0.0
    %v437 = vand.u32 %v49, 4294901760
    %438 = vmatpush1.msra.mxu0 %v437
    %439 = vmatprep.subr.mxu0 0.0
    %v440 = vand.u32 %v50, 4294901760
    %441 = vmatpush1.msra.mxu0 %v440
    %442 = vmatprep.subr.mxu0 0.0
    %v443 = vand.u32 %v51, 4294901760
    %444 = vmatpush1.msra.mxu0 %v443
    %445 = vmatprep.subr.mxu0 0.0
    %v446 = vand.u32 %v52, 4294901760
    %447 = vmatpush1.msra.mxu0 %v446
    %448 = vmatprep.subr.mxu0 0.0
    %v449 = vand.u32 %v53, 4294901760
    %450 = vmatpush1.msra.mxu0 %v449
    %451 = vmatprep.subr.mxu0 0.0
    %v452 = vand.u32 %v54, 4294901760
    %453 = vmatpush1.msra.mxu0 %v452
    %454 = vmatprep.subr.mxu0 0.0
    %v455 = vand.u32 %v55, 4294901760
    %456 = vmatpush1.msra.mxu0 %v455
    %457 = vmatprep.subr.mxu0 0.0
    %v458 = vand.u32 %v56, 4294901760
    %459 = vmatpush1.msra.mxu0 %v458
    %460 = vmatprep.subr.mxu0 0.0
    %v461 = vand.u32 %v57, 4294901760
    %462 = vmatpush1.msra.mxu0 %v461
    %463 = vmatprep.subr.mxu0 0.0
    %v464 = vand.u32 %v58, 4294901760
    %465 = vmatpush1.msra.mxu0 %v464
    %466 = vmatprep.subr.mxu0 0.0
    %v467 = vand.u32 %v59, 4294901760
    %468 = vmatpush1.msra.mxu0 %v467
    %469 = vmatprep.subr.mxu0 0.0
    %v470 = vand.u32 %v60, 4294901760
    %471 = vmatpush1.msra.mxu0 %v470
    %472 = vmatprep.subr.mxu0 0.0
    %473 = vmatpush1.msra.mxu0 0.0
    %474 = vmatprep.subr.mxu0 0.0
    %475 = vmatpush1.msra.mxu0 0.0
    %476 = vmatprep.subr.mxu0 0.0
    %477 = vmatpush1.msra.mxu0 0.0
    %478 = vmatprep.subr.mxu0 0.0
    %479 = vmatpush1.msra.mxu0 0.0
    %480 = vmatprep.subr.mxu0 0.0
    %481 = vmatpush1.msra.mxu0 0.0
    %482 = vmatprep.subr.mxu0 0.0
    %483 = vmatpush1.msra.mxu0 0.0
    %484 = vmatprep.subr.mxu0 0.0
    %485 = vmatpush1.msra.mxu0 0.0
    %486 = vmatprep.subr.mxu0 0.0
    %487 = vmatpush1.msra.mxu0 0.0
    %488 = vmatprep.subr.mxu0 0.0
    %489 = vmatpush1.msra.mxu0 0.0
    %490 = vmatprep.subr.mxu0 0.0
    %491 = vmatpush1.msra.mxu0 0.0
    %492 = vmatprep.subr.mxu0 0.0
    %493 = vmatpush1.msra.mxu0 0.0
    %494 = vmatprep.subr.mxu0 0.0
    %495 = vmatpush1.msra.mxu0 0.0
    %496 = vmatprep.subr.mxu0 0.0
    %497 = vmatpush1.msra.mxu0 0.0
    %498 = vmatprep.subr.mxu0 0.0
    %499 = vmatpush1.msra.mxu0 0.0
    %500 = vmatprep.subr.mxu0 0.0
    %501 = vmatpush1.msra.mxu0 0.0
    %502 = vmatprep.subr.mxu0 0.0
    %503 = vmatpush1.msra.mxu0 0.0
    %504 = vmatprep.mubr.f32.mxu0 0.0
    %v505 = vand.u32 %v72, 4294901760
    %v506 = vsub.f32 %v72, %v505
    %v507 = vand.u32 %v506, 4294901760
    %508 = vmatmul.mubr.f32.gmra.mrb[0].mxu0 %v507
    %v509 = vpop.f32.mrb[0].mxu0
    %v510 = vadd.f32 %v421, %v509
    %v511 = vpop.f32.mrb[0].mxu0
    %512 = vdwg.mxu0
    %513 = vmatprep.subr.mxu0 0.0
    %v514 = vand.u32 %v45, 4294901760
    %v515 = vsub.f32 %v45, %v514
    %v516 = vand.u32 %v515, 4294901760
    %517 = vmatpush1.msra.mxu0 %v516
    %518 = vmatprep.subr.mxu0 0.0
    %v519 = vand.u32 %v46, 4294901760
    %v520 = vsub.f32 %v46, %v519
    %v521 = vand.u32 %v520, 4294901760
    %522 = vmatpush1.msra.mxu0 %v521
    %523 = vmatprep.subr.mxu0 0.0
    %v524 = vand.u32 %v47, 4294901760
    %v525 = vsub.f32 %v47, %v524
    %v526 = vand.u32 %v525, 4294901760
    %527 = vmatpush1.msra.mxu0 %v526
    %528 = vmatprep.subr.mxu0 0.0
    %v529 = vand.u32 %v48, 4294901760
    %v530 = vsub.f32 %v48, %v529
    %v531 = vand.u32 %v530, 4294901760
    %532 = vmatpush1.msra.mxu0 %v531
    %533 = vmatprep.subr.mxu0 0.0
    %v534 = vand.u32 %v49, 4294901760
    %v535 = vsub.f32 %v49, %v534
    %v536 = vand.u32 %v535, 4294901760
    %537 = vmatpush1.msra.mxu0 %v536
    %538 = vmatprep.subr.mxu0 0.0
    %v539 = vand.u32 %v50, 4294901760
    %v540 = vsub.f32 %v50, %v539
    %v541 = vand.u32 %v540, 4294901760
    %542 = vmatpush1.msra.mxu0 %v541
    %543 = vmatprep.subr.mxu0 0.0
    %v544 = vand.u32 %v51, 4294901760
    %v545 = vsub.f32 %v51, %v544
    %v546 = vand.u32 %v545, 4294901760
    %547 = vmatpush1.msra.mxu0 %v546
    %548 = vmatprep.subr.mxu0 0.0
    %v549 = vand.u32 %v52, 4294901760
    %v550 = vsub.f32 %v52, %v549
    %v551 = vand.u32 %v550, 4294901760
    %552 = vmatpush1.msra.mxu0 %v551
    %553 = vmatprep.subr.mxu0 0.0
    %v554 = vand.u32 %v53, 4294901760
    %v555 = vsub.f32 %v53, %v554
    %v556 = vand.u32 %v555, 4294901760
    %557 = vmatpush1.msra.mxu0 %v556
    %558 = vmatprep.subr.mxu0 0.0
    %v559 = vand.u32 %v54, 4294901760
    %v560 = vsub.f32 %v54, %v559
    %v561 = vand.u32 %v560, 4294901760
    %562 = vmatpush1.msra.mxu0 %v561
    %563 = vmatprep.subr.mxu0 0.0
    %v564 = vand.u32 %v55, 4294901760
    %v565 = vsub.f32 %v55, %v564
    %v566 = vand.u32 %v565, 4294901760
    %567 = vmatpush1.msra.mxu0 %v566
    %568 = vmatprep.subr.mxu0 0.0
    %v569 = vand.u32 %v56, 4294901760
    %v570 = vsub.f32 %v56, %v569
    %v571 = vand.u32 %v570, 4294901760
    %572 = vmatpush1.msra.mxu0 %v571
    %573 = vmatprep.subr.mxu0 0.0
    %v574 = vand.u32 %v57, 4294901760
    %v575 = vsub.f32 %v57, %v574
    %v576 = vand.u32 %v575, 4294901760
    %577 = vmatpush1.msra.mxu0 %v576
    %578 = vmatprep.subr.mxu0 0.0
    %v579 = vand.u32 %v58, 4294901760
    %v580 = vsub.f32 %v58, %v579
    %v581 = vand.u32 %v580, 4294901760
    %582 = vmatpush1.msra.mxu0 %v581
    %583 = vmatprep.subr.mxu0 0.0
    %v584 = vand.u32 %v59, 4294901760
    %v585 = vsub.f32 %v59, %v584
    %v586 = vand.u32 %v585, 4294901760
    %587 = vmatpush1.msra.mxu0 %v586
    %588 = vmatprep.subr.mxu0 0.0
    %v589 = vand.u32 %v60, 4294901760
    %v590 = vsub.f32 %v60, %v589
    %v591 = vand.u32 %v590, 4294901760
    %592 = vmatpush1.msra.mxu0 %v591
    %593 = vmatprep.subr.mxu0 0.0
    %594 = vmatpush1.msra.mxu0 0.0
    %595 = vmatprep.subr.mxu0 0.0
    %596 = vmatpush1.msra.mxu0 0.0
    %597 = vmatprep.subr.mxu0 0.0
    %598 = vmatpush1.msra.mxu0 0.0
    %599 = vmatprep.subr.mxu0 0.0
    %600 = vmatpush1.msra.mxu0 0.0
    %601 = vmatprep.subr.mxu0 0.0
    %602 = vmatpush1.msra.mxu0 0.0
    %603 = vmatprep.subr.mxu0 0.0
    %604 = vmatpush1.msra.mxu0 0.0
    %605 = vmatprep.subr.mxu0 0.0
    %606 = vmatpush1.msra.mxu0 0.0
    %607 = vmatprep.subr.mxu0 0.0
    %608 = vmatpush1.msra.mxu0 0.0
    %609 = vmatprep.subr.mxu0 0.0
    %610 = vmatpush1.msra.mxu0 0.0
    %611 = vmatprep.subr.mxu0 0.0
    %612 = vmatpush1.msra.mxu0 0.0
    %613 = vmatprep.subr.mxu0 0.0
    %614 = vmatpush1.msra.mxu0 0.0
    %615 = vmatprep.subr.mxu0 0.0
    %616 = vmatpush1.msra.mxu0 0.0
    %617 = vmatprep.subr.mxu0 0.0
    %618 = vmatpush1.msra.mxu0 0.0
    %619 = vmatprep.subr.mxu0 0.0
    %620 = vmatpush1.msra.mxu0 0.0
    %621 = vmatprep.subr.mxu0 0.0
    %622 = vmatpush1.msra.mxu0 0.0
    %623 = vmatprep.subr.mxu0 0.0
    %624 = vmatpush1.msra.mxu0 0.0
    %625 = vmatprep.mubr.f32.mxu0 0.0
    %v626 = vand.u32 %v72, 4294901760
    %627 = vmatmul.mubr.f32.gmra.mrb[0].mxu0 %v626
    %v628 = vpop.f32.mrb[0].mxu0
    %v629 = vadd.f32 %v510, %v628
    %v630 = vpop.f32.mrb[0].mxu0
    %631 = vdwg.mxu0
    %632 = vmatprep.subr.mxu0 0.0
    %v633 = vand.u32 %v45, 4294901760
    %634 = vmatpush1.msra.mxu0 %v633
    %635 = vmatprep.subr.mxu0 0.0
    %v636 = vand.u32 %v46, 4294901760
    %637 = vmatpush1.msra.mxu0 %v636
    %638 = vmatprep.subr.mxu0 0.0
    %v639 = vand.u32 %v47, 4294901760
    %640 = vmatpush1.msra.mxu0 %v639
    %641 = vmatprep.subr.mxu0 0.0
    %v642 = vand.u32 %v48, 4294901760
    %643 = vmatpush1.msra.mxu0 %v642
    %644 = vmatprep.subr.mxu0 0.0
    %v645 = vand.u32 %v49, 4294901760
    %646 = vmatpush1.msra.mxu0 %v645
    %647 = vmatprep.subr.mxu0 0.0
    %v648 = vand.u32 %v50, 4294901760
    %649 = vmatpush1.msra.mxu0 %v648
    %650 = vmatprep.subr.mxu0 0.0
    %v651 = vand.u32 %v51, 4294901760
    %652 = vmatpush1.msra.mxu0 %v651
    %653 = vmatprep.subr.mxu0 0.0
    %v654 = vand.u32 %v52, 4294901760
    %655 = vmatpush1.msra.mxu0 %v654
    %656 = vmatprep.subr.mxu0 0.0
    %v657 = vand.u32 %v53, 4294901760
    %658 = vmatpush1.msra.mxu0 %v657
    %659 = vmatprep.subr.mxu0 0.0
    %v660 = vand.u32 %v54, 4294901760
    %661 = vmatpush1.msra.mxu0 %v660
    %662 = vmatprep.subr.mxu0 0.0
    %v663 = vand.u32 %v55, 4294901760
    %664 = vmatpush1.msra.mxu0 %v663
    %665 = vmatprep.subr.mxu0 0.0
    %v666 = vand.u32 %v56, 4294901760
    %667 = vmatpush1.msra.mxu0 %v666
    %668 = vmatprep.subr.mxu0 0.0
    %v669 = vand.u32 %v57, 4294901760
    %670 = vmatpush1.msra.mxu0 %v669
    %671 = vmatprep.subr.mxu0 0.0
    %v672 = vand.u32 %v58, 4294901760
    %673 = vmatpush1.msra.mxu0 %v672
    %674 = vmatprep.subr.mxu0 0.0
    %v675 = vand.u32 %v59, 4294901760
    %676 = vmatpush1.msra.mxu0 %v675
    %677 = vmatprep.subr.mxu0 0.0
    %v678 = vand.u32 %v60, 4294901760
    %679 = vmatpush1.msra.mxu0 %v678
    %680 = vmatprep.subr.mxu0 0.0
    %681 = vmatpush1.msra.mxu0 0.0
    %682 = vmatprep.subr.mxu0 0.0
    %683 = vmatpush1.msra.mxu0 0.0
    %684 = vmatprep.subr.mxu0 0.0
    %685 = vmatpush1.msra.mxu0 0.0
    %686 = vmatprep.subr.mxu0 0.0
    %687 = vmatpush1.msra.mxu0 0.0
    %688 = vmatprep.subr.mxu0 0.0
    %689 = vmatpush1.msra.mxu0 0.0
    %690 = vmatprep.subr.mxu0 0.0
    %691 = vmatpush1.msra.mxu0 0.0
    %692 = vmatprep.subr.mxu0 0.0
    %693 = vmatpush1.msra.mxu0 0.0
    %694 = vmatprep.subr.mxu0 0.0
    %695 = vmatpush1.msra.mxu0 0.0
    %696 = vmatprep.subr.mxu0 0.0
    %697 = vmatpush1.msra.mxu0 0.0
    %698 = vmatprep.subr.mxu0 0.0
    %699 = vmatpush1.msra.mxu0 0.0
    %700 = vmatprep.subr.mxu0 0.0
    %701 = vmatpush1.msra.mxu0 0.0
    %702 = vmatprep.subr.mxu0 0.0
    %703 = vmatpush1.msra.mxu0 0.0
    %704 = vmatprep.subr.mxu0 0.0
    %705 = vmatpush1.msra.mxu0 0.0
    %706 = vmatprep.subr.mxu0 0.0
    %707 = vmatpush1.msra.mxu0 0.0
    %708 = vmatprep.subr.mxu0 0.0
    %709 = vmatpush1.msra.mxu0 0.0
    %710 = vmatprep.subr.mxu0 0.0
    %711 = vmatpush1.msra.mxu0 0.0
    %712 = vmatprep.mubr.f32.mxu0 0.0
    %v713 = vand.u32 %v72, 4294901760
    %714 = vmatmul.mubr.f32.gmra.mrb[0].mxu0 %v713
    %v715 = vpop.f32.mrb[0].mxu0
    %v716 = vadd.f32 %v629, %v715
    %v717 = vpop.f32.mrb[0].mxu0
    %718 = vdwg.mxu0
    %v719 = vmul.f32 %v72, %v72
    %721 = vset.pattern.permute.xlu0 0
    %722 = vperm.xlu0 %721, %v65
    %v723 = vpop.permute.xlu0 %722
    %725 = vmatprep.subr.mxu0 0.0
    %v726 = vand.u32 %v45, 4294901760
    %727 = vmatpush1.msra.mxu0 %v726
    %728 = vmatprep.subr.mxu0 0.0
    %v729 = vand.u32 %v46, 4294901760
    %730 = vmatpush1.msra.mxu0 %v729
    %731 = vmatprep.subr.mxu0 0.0
    %v732 = vand.u32 %v47, 4294901760
    %733 = vmatpush1.msra.mxu0 %v732
    %734 = vmatprep.subr.mxu0 0.0
    %v735 = vand.u32 %v48, 4294901760
    %736 = vmatpush1.msra.mxu0 %v735
    %737 = vmatprep.subr.mxu0 0.0
    %v738 = vand.u32 %v49, 4294901760
    %739 = vmatpush1.msra.mxu0 %v738
    %740 = vmatprep.subr.mxu0 0.0
    %v741 = vand.u32 %v50, 4294901760
    %742 = vmatpush1.msra.mxu0 %v741
    %743 = vmatprep.subr.mxu0 0.0
    %v744 = vand.u32 %v51, 4294901760
    %745 = vmatpush1.msra.mxu0 %v744
    %746 = vmatprep.subr.mxu0 0.0
    %v747 = vand.u32 %v52, 4294901760
    %748 = vmatpush1.msra.mxu0 %v747
    %749 = vmatprep.subr.mxu0 0.0
    %v750 = vand.u32 %v53, 4294901760
    %751 = vmatpush1.msra.mxu0 %v750
    %752 = vmatprep.subr.mxu0 0.0
    %v753 = vand.u32 %v54, 4294901760
    %754 = vmatpush1.msra.mxu0 %v753
    %755 = vmatprep.subr.mxu0 0.0
    %v756 = vand.u32 %v55, 4294901760
    %757 = vmatpush1.msra.mxu0 %v756
    %758 = vmatprep.subr.mxu0 0.0
    %v759 = vand.u32 %v56, 4294901760
    %760 = vmatpush1.msra.mxu0 %v759
    %761 = vmatprep.subr.mxu0 0.0
    %v762 = vand.u32 %v57, 4294901760
    %763 = vmatpush1.msra.mxu0 %v762
    %764 = vmatprep.subr.mxu0 0.0
    %v765 = vand.u32 %v58, 4294901760
    %766 = vmatpush1.msra.mxu0 %v765
    %767 = vmatprep.subr.mxu0 0.0
    %v768 = vand.u32 %v59, 4294901760
    %769 = vmatpush1.msra.mxu0 %v768
    %770 = vmatprep.subr.mxu0 0.0
    %v771 = vand.u32 %v60, 4294901760
    %772 = vmatpush1.msra.mxu0 %v771
    %773 = vmatprep.subr.mxu0 0.0
    %774 = vmatpush1.msra.mxu0 0.0
    %775 = vmatprep.subr.mxu0 0.0
    %776 = vmatpush1.msra.mxu0 0.0
    %777 = vmatprep.subr.mxu0 0.0
    %778 = vmatpush1.msra.mxu0 0.0
    %779 = vmatprep.subr.mxu0 0.0
    %780 = vmatpush1.msra.mxu0 0.0
    %781 = vmatprep.subr.mxu0 0.0
    %782 = vmatpush1.msra.mxu0 0.0
    %783 = vmatprep.subr.mxu0 0.0
    %784 = vmatpush1.msra.mxu0 0.0
    %785 = vmatprep.subr.mxu0 0.0
    %786 = vmatpush1.msra.mxu0 0.0
    %787 = vmatprep.subr.mxu0 0.0
    %788 = vmatpush1.msra.mxu0 0.0
    %789 = vmatprep.subr.mxu0 0.0
    %790 = vmatpush1.msra.mxu0 0.0
    %791 = vmatprep.subr.mxu0 0.0
    %792 = vmatpush1.msra.mxu0 0.0
    %793 = vmatprep.subr.mxu0 0.0
    %794 = vmatpush1.msra.mxu0 0.0
    %795 = vmatprep.subr.mxu0 0.0
    %796 = vmatpush1.msra.mxu0 0.0
    %797 = vmatprep.subr.mxu0 0.0
    %798 = vmatpush1.msra.mxu0 0.0
    %799 = vmatprep.subr.mxu0 0.0
    %800 = vmatpush1.msra.mxu0 0.0
    %801 = vmatprep.subr.mxu0 0.0
    %802 = vmatpush1.msra.mxu0 0.0
    %803 = vmatprep.subr.mxu0 0.0
    %804 = vmatpush1.msra.mxu0 0.0
    %805 = vmatprep.mubr.f32.mxu0 0.0
    %v806 = vand.u32 %v719, 4294901760
    %v807 = vsub.f32 %v719, %v806
    %v808 = vand.u32 %v807, 4294901760
    %v809 = vsub.f32 %v807, %v808
    %v810 = vand.u32 %v809, 4294901760
    %811 = vmatmul.mubr.f32.gmra.mrb[0].mxu0 %v810
    %v812 = vpop.f32.mrb[0].mxu0
    %v813 = vadd.f32 %v723, %v812
    %v814 = vpop.f32.mrb[0].mxu0
    %815 = vdwg.mxu0
    %816 = vmatprep.subr.mxu0 0.0
    %v817 = vand.u32 %v45, 4294901760
    %v818 = vsub.f32 %v45, %v817
    %v819 = vand.u32 %v818, 4294901760
    %v820 = vsub.f32 %v818, %v819
    %v821 = vand.u32 %v820, 4294901760
    %822 = vmatpush1.msra.mxu0 %v821
    %823 = vmatprep.subr.mxu0 0.0
    %v824 = vand.u32 %v46, 4294901760
    %v825 = vsub.f32 %v46, %v824
    %v826 = vand.u32 %v825, 4294901760
    %v827 = vsub.f32 %v825, %v826
    %v828 = vand.u32 %v827, 4294901760
    %829 = vmatpush1.msra.mxu0 %v828
    %830 = vmatprep.subr.mxu0 0.0
    %v831 = vand.u32 %v47, 4294901760
    %v832 = vsub.f32 %v47, %v831
    %v833 = vand.u32 %v832, 4294901760
    %v834 = vsub.f32 %v832, %v833
    %v835 = vand.u32 %v834, 4294901760
    %836 = vmatpush1.msra.mxu0 %v835
    %837 = vmatprep.subr.mxu0 0.0
    %v838 = vand.u32 %v48, 4294901760
    %v839 = vsub.f32 %v48, %v838
    %v840 = vand.u32 %v839, 4294901760
    %v841 = vsub.f32 %v839, %v840
    %v842 = vand.u32 %v841, 4294901760
    %843 = vmatpush1.msra.mxu0 %v842
    %844 = vmatprep.subr.mxu0 0.0
    %v845 = vand.u32 %v49, 4294901760
    %v846 = vsub.f32 %v49, %v845
    %v847 = vand.u32 %v846, 4294901760
    %v848 = vsub.f32 %v846, %v847
    %v849 = vand.u32 %v848, 4294901760
    %850 = vmatpush1.msra.mxu0 %v849
    %851 = vmatprep.subr.mxu0 0.0
    %v852 = vand.u32 %v50, 4294901760
    %v853 = vsub.f32 %v50, %v852
    %v854 = vand.u32 %v853, 4294901760
    %v855 = vsub.f32 %v853, %v854
    %v856 = vand.u32 %v855, 4294901760
    %857 = vmatpush1.msra.mxu0 %v856
    %858 = vmatprep.subr.mxu0 0.0
    %v859 = vand.u32 %v51, 4294901760
    %v860 = vsub.f32 %v51, %v859
    %v861 = vand.u32 %v860, 4294901760
    %v862 = vsub.f32 %v860, %v861
    %v863 = vand.u32 %v862, 4294901760
    %864 = vmatpush1.msra.mxu0 %v863
    %865 = vmatprep.subr.mxu0 0.0
    %v866 = vand.u32 %v52, 4294901760
    %v867 = vsub.f32 %v52, %v866
    %v868 = vand.u32 %v867, 4294901760
    %v869 = vsub.f32 %v867, %v868
    %v870 = vand.u32 %v869, 4294901760
    %871 = vmatpush1.msra.mxu0 %v870
    %872 = vmatprep.subr.mxu0 0.0
    %v873 = vand.u32 %v53, 4294901760
    %v874 = vsub.f32 %v53, %v873
    %v875 = vand.u32 %v874, 4294901760
    %v876 = vsub.f32 %v874, %v875
    %v877 = vand.u32 %v876, 4294901760
    %878 = vmatpush1.msra.mxu0 %v877
    %879 = vmatprep.subr.mxu0 0.0
    %v880 = vand.u32 %v54, 4294901760
    %v881 = vsub.f32 %v54, %v880
    %v882 = vand.u32 %v881, 4294901760
    %v883 = vsub.f32 %v881, %v882
    %v884 = vand.u32 %v883, 4294901760
    %885 = vmatpush1.msra.mxu0 %v884
    %886 = vmatprep.subr.mxu0 0.0
    %v887 = vand.u32 %v55, 4294901760
    %v888 = vsub.f32 %v55, %v887
    %v889 = vand.u32 %v888, 4294901760
    %v890 = vsub.f32 %v888, %v889
    %v891 = vand.u32 %v890, 4294901760
    %892 = vmatpush1.msra.mxu0 %v891
    %893 = vmatprep.subr.mxu0 0.0
    %v894 = vand.u32 %v56, 4294901760
    %v895 = vsub.f32 %v56, %v894
    %v896 = vand.u32 %v895, 4294901760
    %v897 = vsub.f32 %v895, %v896
    %v898 = vand.u32 %v897, 4294901760
    %899 = vmatpush1.msra.mxu0 %v898
    %900 = vmatprep.subr.mxu0 0.0
    %v901 = vand.u32 %v57, 4294901760
    %v902 = vsub.f32 %v57, %v901
    %v903 = vand.u32 %v902, 4294901760
    %v904 = vsub.f32 %v902, %v903
    %v905 = vand.u32 %v904, 4294901760
    %906 = vmatpush1.msra.mxu0 %v905
    %907 = vmatprep.subr.mxu0 0.0
    %v908 = vand.u32 %v58, 4294901760
    %v909 = vsub.f32 %v58, %v908
    %v910 = vand.u32 %v909, 4294901760
    %v911 = vsub.f32 %v909, %v910
    %v912 = vand.u32 %v911, 4294901760
    %913 = vmatpush1.msra.mxu0 %v912
    %914 = vmatprep.subr.mxu0 0.0
    %v915 = vand.u32 %v59, 4294901760
    %v916 = vsub.f32 %v59, %v915
    %v917 = vand.u32 %v916, 4294901760
    %v918 = vsub.f32 %v916, %v917
    %v919 = vand.u32 %v918, 4294901760
    %920 = vmatpush1.msra.mxu0 %v919
    %921 = vmatprep.subr.mxu0 0.0
    %v922 = vand.u32 %v60, 4294901760
    %v923 = vsub.f32 %v60, %v922
    %v924 = vand.u32 %v923, 4294901760
    %v925 = vsub.f32 %v923, %v924
    %v926 = vand.u32 %v925, 4294901760
    %927 = vmatpush1.msra.mxu0 %v926
    %928 = vmatprep.subr.mxu0 0.0
    %929 = vmatpush1.msra.mxu0 0.0
    %930 = vmatprep.subr.mxu0 0.0
    %931 = vmatpush1.msra.mxu0 0.0
    %932 = vmatprep.subr.mxu0 0.0
    %933 = vmatpush1.msra.mxu0 0.0
    %934 = vmatprep.subr.mxu0 0.0
    %935 = vmatpush1.msra.mxu0 0.0
    %936 = vmatprep.subr.mxu0 0.0
    %937 = vmatpush1.msra.mxu0 0.0
    %938 = vmatprep.subr.mxu0 0.0
    %939 = vmatpush1.msra.mxu0 0.0
    %940 = vmatprep.subr.mxu0 0.0
    %941 = vmatpush1.msra.mxu0 0.0
    %942 = vmatprep.subr.mxu0 0.0
    %943 = vmatpush1.msra.mxu0 0.0
    %944 = vmatprep.subr.mxu0 0.0
    %945 = vmatpush1.msra.mxu0 0.0
    %946 = vmatprep.subr.mxu0 0.0
    %947 = vmatpush1.msra.mxu0 0.0
    %948 = vmatprep.subr.mxu0 0.0
    %949 = vmatpush1.msra.mxu0 0.0
    %950 = vmatprep.subr.mxu0 0.0
    %951 = vmatpush1.msra.mxu0 0.0
    %952 = vmatprep.subr.mxu0 0.0
    %953 = vmatpush1.msra.mxu0 0.0
    %954 = vmatprep.subr.mxu0 0.0
    %955 = vmatpush1.msra.mxu0 0.0
    %956 = vmatprep.subr.mxu0 0.0
    %957 = vmatpush1.msra.mxu0 0.0
    %958 = vmatprep.subr.mxu0 0.0
    %959 = vmatpush1.msra.mxu0 0.0
    %960 = vmatprep.mubr.f32.mxu0 0.0
    %v961 = vand.u32 %v719, 4294901760
    %962 = vmatmul.mubr.f32.gmra.mrb[0].mxu0 %v961
    %v963 = vpop.f32.mrb[0].mxu0
    %v964 = vadd.f32 %v813, %v963
    %v965 = vpop.f32.mrb[0].mxu0
    %966 = vdwg.mxu0
    %967 = vmatprep.subr.mxu0 0.0
    %v968 = vand.u32 %v45, 4294901760
    %v969 = vsub.f32 %v45, %v968
    %970 = vmatpush1.msra.mxu0 %v969
    %971 = vmatprep.subr.mxu0 0.0
    %v972 = vand.u32 %v46, 4294901760
    %v973 = vsub.f32 %v46, %v972
    %974 = vmatpush1.msra.mxu0 %v973
    %975 = vmatprep.subr.mxu0 0.0
    %v976 = vand.u32 %v47, 4294901760
    %v977 = vsub.f32 %v47, %v976
    %978 = vmatpush1.msra.mxu0 %v977
    %979 = vmatprep.subr.mxu0 0.0
    %v980 = vand.u32 %v48, 4294901760
    %v981 = vsub.f32 %v48, %v980
    %982 = vmatpush1.msra.mxu0 %v981
    %983 = vmatprep.subr.mxu0 0.0
    %v984 = vand.u32 %v49, 4294901760
    %v985 = vsub.f32 %v49, %v984
    %986 = vmatpush1.msra.mxu0 %v985
    %987 = vmatprep.subr.mxu0 0.0
    %v988 = vand.u32 %v50, 4294901760
    %v989 = vsub.f32 %v50, %v988
    %990 = vmatpush1.msra.mxu0 %v989
    %991 = vmatprep.subr.mxu0 0.0
    %v992 = vand.u32 %v51, 4294901760
    %v993 = vsub.f32 %v51, %v992
    %994 = vmatpush1.msra.mxu0 %v993
    %995 = vmatprep.subr.mxu0 0.0
    %v996 = vand.u32 %v52, 4294901760
    %v997 = vsub.f32 %v52, %v996
    %998 = vmatpush1.msra.mxu0 %v997
    %999 = vmatprep.subr.mxu0 0.0
    %v1000 = vand.u32 %v53, 4294901760
    %v1001 = vsub.f32 %v53, %v1000
    %1002 = vmatpush1.msra.mxu0 %v1001
    %1003 = vmatprep.subr.mxu0 0.0
    %v1004 = vand.u32 %v54, 4294901760
    %v1005 = vsub.f32 %v54, %v1004
    %1006 = vmatpush1.msra.mxu0 %v1005
    %1007 = vmatprep.subr.mxu0 0.0
    %v1008 = vand.u32 %v55, 4294901760
    %v1009 = vsub.f32 %v55, %v1008
    %1010 = vmatpush1.msra.mxu0 %v1009
    %1011 = vmatprep.subr.mxu0 0.0
    %v1012 = vand.u32 %v56, 4294901760
    %v1013 = vsub.f32 %v56, %v1012
    %1014 = vmatpush1.msra.mxu0 %v1013
    %1015 = vmatprep.subr.mxu0 0.0
    %v1016 = vand.u32 %v57, 4294901760
    %v1017 = vsub.f32 %v57, %v1016
    %1018 = vmatpush1.msra.mxu0 %v1017
    %1019 = vmatprep.subr.mxu0 0.0
    %v1020 = vand.u32 %v58, 4294901760
    %v1021 = vsub.f32 %v58, %v1020
    %1022 = vmatpush1.msra.mxu0 %v1021
    %1023 = vmatprep.subr.mxu0 0.0
    %v1024 = vand.u32 %v59, 4294901760
    %v1025 = vsub.f32 %v59, %v1024
    %1026 = vmatpush1.msra.mxu0 %v1025
    %1027 = vmatprep.subr.mxu0 0.0
    %v1028 = vand.u32 %v60, 4294901760
    %v1029 = vsub.f32 %v60, %v1028
    %1030 = vmatpush1.msra.mxu0 %v1029
    %1031 = vmatprep.subr.mxu0 0.0
    %1032 = vmatpush1.msra.mxu0 0.0
    %1033 = vmatprep.subr.mxu0 0.0
    %1034 = vmatpush1.msra.mxu0 0.0
    %1035 = vmatprep.subr.mxu0 0.0
    %1036 = vmatpush1.msra.mxu0 0.0
    %1037 = vmatprep.subr.mxu0 0.0
    %1038 = vmatpush1.msra.mxu0 0.0
    %1039 = vmatprep.subr.mxu0 0.0
    %1040 = vmatpush1.msra.mxu0 0.0
    %1041 = vmatprep.subr.mxu0 0.0
    %1042 = vmatpush1.msra.mxu0 0.0
    %1043 = vmatprep.subr.mxu0 0.0
    %1044 = vmatpush1.msra.mxu0 0.0
    %1045 = vmatprep.subr.mxu0 0.0
    %1046 = vmatpush1.msra.mxu0 0.0
    %1047 = vmatprep.subr.mxu0 0.0
    %1048 = vmatpush1.msra.mxu0 0.0
    %1049 = vmatprep.subr.mxu0 0.0
    %1050 = vmatpush1.msra.mxu0 0.0
    %1051 = vmatprep.subr.mxu0 0.0
    %1052 = vmatpush1.msra.mxu0 0.0
    %1053 = vmatprep.subr.mxu0 0.0
    %1054 = vmatpush1.msra.mxu0 0.0
    %1055 = vmatprep.subr.mxu0 0.0
    %1056 = vmatpush1.msra.mxu0 0.0
    %1057 = vmatprep.subr.mxu0 0.0
    %1058 = vmatpush1.msra.mxu0 0.0
    %1059 = vmatprep.subr.mxu0 0.0
    %1060 = vmatpush1.msra.mxu0 0.0
    %1061 = vmatprep.subr.mxu0 0.0
    %1062 = vmatpush1.msra.mxu0 0.0
    %1063 = vmatprep.mubr.f32.mxu0 0.0
    %v1064 = vand.u32 %v719, 4294901760
    %v1065 = vsub.f32 %v719, %v1064
    %1066 = vmatmul.mubr.f32.gmra.mrb[0].mxu0 %v1065
    %v1067 = vpop.f32.mrb[0].mxu0
    %v1068 = vadd.f32 %v964, %v1067
    %v1069 = vpop.f32.mrb[0].mxu0
    %1070 = vdwg.mxu0
    %1071 = vmatprep.subr.mxu0 0.0
    %v1072 = vand.u32 %v45, 4294901760
    %1073 = vmatpush1.msra.mxu0 %v1072
    %1074 = vmatprep.subr.mxu0 0.0
    %v1075 = vand.u32 %v46, 4294901760
    %1076 = vmatpush1.msra.mxu0 %v1075
    %1077 = vmatprep.subr.mxu0 0.0
    %v1078 = vand.u32 %v47, 4294901760
    %1079 = vmatpush1.msra.mxu0 %v1078
    %1080 = vmatprep.subr.mxu0 0.0
    %v1081 = vand.u32 %v48, 4294901760
    %1082 = vmatpush1.msra.mxu0 %v1081
    %1083 = vmatprep.subr.mxu0 0.0
    %v1084 = vand.u32 %v49, 4294901760
    %1085 = vmatpush1.msra.mxu0 %v1084
    %1086 = vmatprep.subr.mxu0 0.0
    %v1087 = vand.u32 %v50, 4294901760
    %1088 = vmatpush1.msra.mxu0 %v1087
    %1089 = vmatprep.subr.mxu0 0.0
    %v1090 = vand.u32 %v51, 4294901760
    %1091 = vmatpush1.msra.mxu0 %v1090
    %1092 = vmatprep.subr.mxu0 0.0
    %v1093 = vand.u32 %v52, 4294901760
    %1094 = vmatpush1.msra.mxu0 %v1093
    %1095 = vmatprep.subr.mxu0 0.0
    %v1096 = vand.u32 %v53, 4294901760
    %1097 = vmatpush1.msra.mxu0 %v1096
    %1098 = vmatprep.subr.mxu0 0.0
    %v1099 = vand.u32 %v54, 4294901760
    %1100 = vmatpush1.msra.mxu0 %v1099
    %1101 = vmatprep.subr.mxu0 0.0
    %v1102 = vand.u32 %v55, 4294901760
    %1103 = vmatpush1.msra.mxu0 %v1102
    %1104 = vmatprep.subr.mxu0 0.0
    %v1105 = vand.u32 %v56, 4294901760
    %1106 = vmatpush1.msra.mxu0 %v1105
    %1107 = vmatprep.subr.mxu0 0.0
    %v1108 = vand.u32 %v57, 4294901760
    %1109 = vmatpush1.msra.mxu0 %v1108
    %1110 = vmatprep.subr.mxu0 0.0
    %v1111 = vand.u32 %v58, 4294901760
    %1112 = vmatpush1.msra.mxu0 %v1111
    %1113 = vmatprep.subr.mxu0 0.0
    %v1114 = vand.u32 %v59, 4294901760
    %1115 = vmatpush1.msra.mxu0 %v1114
    %1116 = vmatprep.subr.mxu0 0.0
    %v1117 = vand.u32 %v60, 4294901760
    %1118 = vmatpush1.msra.mxu0 %v1117
    %1119 = vmatprep.subr.mxu0 0.0
    %1120 = vmatpush1.msra.mxu0 0.0
    %1121 = vmatprep.subr.mxu0 0.0
    %1122 = vmatpush1.msra.mxu0 0.0
    %1123 = vmatprep.subr.mxu0 0.0
    %1124 = vmatpush1.msra.mxu0 0.0
    %1125 = vmatprep.subr.mxu0 0.0
    %1126 = vmatpush1.msra.mxu0 0.0
    %1127 = vmatprep.subr.mxu0 0.0
    %1128 = vmatpush1.msra.mxu0 0.0
    %1129 = vmatprep.subr.mxu0 0.0
    %1130 = vmatpush1.msra.mxu0 0.0
    %1131 = vmatprep.subr.mxu0 0.0
    %1132 = vmatpush1.msra.mxu0 0.0
    %1133 = vmatprep.subr.mxu0 0.0
    %1134 = vmatpush1.msra.mxu0 0.0
    %1135 = vmatprep.subr.mxu0 0.0
    %1136 = vmatpush1.msra.mxu0 0.0
    %1137 = vmatprep.subr.mxu0 0.0
    %1138 = vmatpush1.msra.mxu0 0.0
    %1139 = vmatprep.subr.mxu0 0.0
    %1140 = vmatpush1.msra.mxu0 0.0
    %1141 = vmatprep.subr.mxu0 0.0
    %1142 = vmatpush1.msra.mxu0 0.0
    %1143 = vmatprep.subr.mxu0 0.0
    %1144 = vmatpush1.msra.mxu0 0.0
    %1145 = vmatprep.subr.mxu0 0.0
    %1146 = vmatpush1.msra.mxu0 0.0
    %1147 = vmatprep.subr.mxu0 0.0
    %1148 = vmatpush1.msra.mxu0 0.0
    %1149 = vmatprep.subr.mxu0 0.0
    %1150 = vmatpush1.msra.mxu0 0.0
    %1151 = vmatprep.mubr.f32.mxu0 0.0
    %v1152 = vand.u32 %v719, 4294901760
    %v1153 = vsub.f32 %v719, %v1152
    %v1154 = vand.u32 %v1153, 4294901760
    %1155 = vmatmul.mubr.f32.gmra.mrb[0].mxu0 %v1154
    %v1156 = vpop.f32.mrb[0].mxu0
    %v1157 = vadd.f32 %v1068, %v1156
    %v1158 = vpop.f32.mrb[0].mxu0
    %1159 = vdwg.mxu0
    %1160 = vmatprep.subr.mxu0 0.0
    %v1161 = vand.u32 %v45, 4294901760
    %v1162 = vsub.f32 %v45, %v1161
    %v1163 = vand.u32 %v1162, 4294901760
    %1164 = vmatpush1.msra.mxu0 %v1163
    %1165 = vmatprep.subr.mxu0 0.0
    %v1166 = vand.u32 %v46, 4294901760
    %v1167 = vsub.f32 %v46, %v1166
    %v1168 = vand.u32 %v1167, 4294901760
    %1169 = vmatpush1.msra.mxu0 %v1168
    %1170 = vmatprep.subr.mxu0 0.0
    %v1171 = vand.u32 %v47, 4294901760
    %v1172 = vsub.f32 %v47, %v1171
    %v1173 = vand.u32 %v1172, 4294901760
    %1174 = vmatpush1.msra.mxu0 %v1173
    %1175 = vmatprep.subr.mxu0 0.0
    %v1176 = vand.u32 %v48, 4294901760
    %v1177 = vsub.f32 %v48, %v1176
    %v1178 = vand.u32 %v1177, 4294901760
    %1179 = vmatpush1.msra.mxu0 %v1178
    %1180 = vmatprep.subr.mxu0 0.0
    %v1181 = vand.u32 %v49, 4294901760
    %v1182 = vsub.f32 %v49, %v1181
    %v1183 = vand.u32 %v1182, 4294901760
    %1184 = vmatpush1.msra.mxu0 %v1183
    %1185 = vmatprep.subr.mxu0 0.0
    %v1186 = vand.u32 %v50, 4294901760
    %v1187 = vsub.f32 %v50, %v1186
    %v1188 = vand.u32 %v1187, 4294901760
    %1189 = vmatpush1.msra.mxu0 %v1188
    %1190 = vmatprep.subr.mxu0 0.0
    %v1191 = vand.u32 %v51, 4294901760
    %v1192 = vsub.f32 %v51, %v1191
    %v1193 = vand.u32 %v1192, 4294901760
    %1194 = vmatpush1.msra.mxu0 %v1193
    %1195 = vmatprep.subr.mxu0 0.0
    %v1196 = vand.u32 %v52, 4294901760
    %v1197 = vsub.f32 %v52, %v1196
    %v1198 = vand.u32 %v1197, 4294901760
    %1199 = vmatpush1.msra.mxu0 %v1198
    %1200 = vmatprep.subr.mxu0 0.0
    %v1201 = vand.u32 %v53, 4294901760
    %v1202 = vsub.f32 %v53, %v1201
    %v1203 = vand.u32 %v1202, 4294901760
    %1204 = vmatpush1.msra.mxu0 %v1203
    %1205 = vmatprep.subr.mxu0 0.0
    %v1206 = vand.u32 %v54, 4294901760
    %v1207 = vsub.f32 %v54, %v1206
    %v1208 = vand.u32 %v1207, 4294901760
    %1209 = vmatpush1.msra.mxu0 %v1208
    %1210 = vmatprep.subr.mxu0 0.0
    %v1211 = vand.u32 %v55, 4294901760
    %v1212 = vsub.f32 %v55, %v1211
    %v1213 = vand.u32 %v1212, 4294901760
    %1214 = vmatpush1.msra.mxu0 %v1213
    %1215 = vmatprep.subr.mxu0 0.0
    %v1216 = vand.u32 %v56, 4294901760
    %v1217 = vsub.f32 %v56, %v1216
    %v1218 = vand.u32 %v1217, 4294901760
    %1219 = vmatpush1.msra.mxu0 %v1218
    %1220 = vmatprep.subr.mxu0 0.0
    %v1221 = vand.u32 %v57, 4294901760
    %v1222 = vsub.f32 %v57, %v1221
    %v1223 = vand.u32 %v1222, 4294901760
    %1224 = vmatpush1.msra.mxu0 %v1223
    %1225 = vmatprep.subr.mxu0 0.0
    %v1226 = vand.u32 %v58, 4294901760
    %v1227 = vsub.f32 %v58, %v1226
    %v1228 = vand.u32 %v1227, 4294901760
    %1229 = vmatpush1.msra.mxu0 %v1228
    %1230 = vmatprep.subr.mxu0 0.0
    %v1231 = vand.u32 %v59, 4294901760
    %v1232 = vsub.f32 %v59, %v1231
    %v1233 = vand.u32 %v1232, 4294901760
    %1234 = vmatpush1.msra.mxu0 %v1233
    %1235 = vmatprep.subr.mxu0 0.0
    %v1236 = vand.u32 %v60, 4294901760
    %v1237 = vsub.f32 %v60, %v1236
    %v1238 = vand.u32 %v1237, 4294901760
    %1239 = vmatpush1.msra.mxu0 %v1238
    %1240 = vmatprep.subr.mxu0 0.0
    %1241 = vmatpush1.msra.mxu0 0.0
    %1242 = vmatprep.subr.mxu0 0.0
    %1243 = vmatpush1.msra.mxu0 0.0
    %1244 = vmatprep.subr.mxu0 0.0
    %1245 = vmatpush1.msra.mxu0 0.0
    %1246 = vmatprep.subr.mxu0 0.0
    %1247 = vmatpush1.msra.mxu0 0.0
    %1248 = vmatprep.subr.mxu0 0.0
    %1249 = vmatpush1.msra.mxu0 0.0
    %1250 = vmatprep.subr.mxu0 0.0
    %1251 = vmatpush1.msra.mxu0 0.0
    %1252 = vmatprep.subr.mxu0 0.0
    %1253 = vmatpush1.msra.mxu0 0.0
    %1254 = vmatprep.subr.mxu0 0.0
    %1255 = vmatpush1.msra.mxu0 0.0
    %1256 = vmatprep.subr.mxu0 0.0
    %1257 = vmatpush1.msra.mxu0 0.0
    %1258 = vmatprep.subr.mxu0 0.0
    %1259 = vmatpush1.msra.mxu0 0.0
    %1260 = vmatprep.subr.mxu0 0.0
    %1261 = vmatpush1.msra.mxu0 0.0
    %1262 = vmatprep.subr.mxu0 0.0
    %1263 = vmatpush1.msra.mxu0 0.0
    %1264 = vmatprep.subr.mxu0 0.0
    %1265 = vmatpush1.msra.mxu0 0.0
    %1266 = vmatprep.subr.mxu0 0.0
    %1267 = vmatpush1.msra.mxu0 0.0
    %1268 = vmatprep.subr.mxu0 0.0
    %1269 = vmatpush1.msra.mxu0 0.0
    %1270 = vmatprep.subr.mxu0 0.0
    %1271 = vmatpush1.msra.mxu0 0.0
    %1272 = vmatprep.mubr.f32.mxu0 0.0
    %v1273 = vand.u32 %v719, 4294901760
    %1274 = vmatmul.mubr.f32.gmra.mrb[0].mxu0 %v1273
    %v1275 = vpop.f32.mrb[0].mxu0
    %v1276 = vadd.f32 %v1157, %v1275
    %v1277 = vpop.f32.mrb[0].mxu0
    %1278 = vdwg.mxu0
    %1279 = vmatprep.subr.mxu0 0.0
    %v1280 = vand.u32 %v45, 4294901760
    %1281 = vmatpush1.msra.mxu0 %v1280
    %1282 = vmatprep.subr.mxu0 0.0
    %v1283 = vand.u32 %v46, 4294901760
    %1284 = vmatpush1.msra.mxu0 %v1283
    %1285 = vmatprep.subr.mxu0 0.0
    %v1286 = vand.u32 %v47, 4294901760
    %1287 = vmatpush1.msra.mxu0 %v1286
    %1288 = vmatprep.subr.mxu0 0.0
    %v1289 = vand.u32 %v48, 4294901760
    %1290 = vmatpush1.msra.mxu0 %v1289
    %1291 = vmatprep.subr.mxu0 0.0
    %v1292 = vand.u32 %v49, 4294901760
    %1293 = vmatpush1.msra.mxu0 %v1292
    %1294 = vmatprep.subr.mxu0 0.0
    %v1295 = vand.u32 %v50, 4294901760
    %1296 = vmatpush1.msra.mxu0 %v1295
    %1297 = vmatprep.subr.mxu0 0.0
    %v1298 = vand.u32 %v51, 4294901760
    %1299 = vmatpush1.msra.mxu0 %v1298
    %1300 = vmatprep.subr.mxu0 0.0
    %v1301 = vand.u32 %v52, 4294901760
    %1302 = vmatpush1.msra.mxu0 %v1301
    %1303 = vmatprep.subr.mxu0 0.0
    %v1304 = vand.u32 %v53, 4294901760
    %1305 = vmatpush1.msra.mxu0 %v1304
    %1306 = vmatprep.subr.mxu0 0.0
    %v1307 = vand.u32 %v54, 4294901760
    %1308 = vmatpush1.msra.mxu0 %v1307
    %1309 = vmatprep.subr.mxu0 0.0
    %v1310 = vand.u32 %v55, 4294901760
    %1311 = vmatpush1.msra.mxu0 %v1310
    %1312 = vmatprep.subr.mxu0 0.0
    %v1313 = vand.u32 %v56, 4294901760
    %1314 = vmatpush1.msra.mxu0 %v1313
    %1315 = vmatprep.subr.mxu0 0.0
    %v1316 = vand.u32 %v57, 4294901760
    %1317 = vmatpush1.msra.mxu0 %v1316
    %1318 = vmatprep.subr.mxu0 0.0
    %v1319 = vand.u32 %v58, 4294901760
    %1320 = vmatpush1.msra.mxu0 %v1319
    %1321 = vmatprep.subr.mxu0 0.0
    %v1322 = vand.u32 %v59, 4294901760
    %1323 = vmatpush1.msra.mxu0 %v1322
    %1324 = vmatprep.subr.mxu0 0.0
    %v1325 = vand.u32 %v60, 4294901760
    %1326 = vmatpush1.msra.mxu0 %v1325
    %1327 = vmatprep.subr.mxu0 0.0
    %1328 = vmatpush1.msra.mxu0 0.0
    %1329 = vmatprep.subr.mxu0 0.0
    %1330 = vmatpush1.msra.mxu0 0.0
    %1331 = vmatprep.subr.mxu0 0.0
    %1332 = vmatpush1.msra.mxu0 0.0
    %1333 = vmatprep.subr.mxu0 0.0
    %1334 = vmatpush1.msra.mxu0 0.0
    %1335 = vmatprep.subr.mxu0 0.0
    %1336 = vmatpush1.msra.mxu0 0.0
    %1337 = vmatprep.subr.mxu0 0.0
    %1338 = vmatpush1.msra.mxu0 0.0
    %1339 = vmatprep.subr.mxu0 0.0
    %1340 = vmatpush1.msra.mxu0 0.0
    %1341 = vmatprep.subr.mxu0 0.0
    %1342 = vmatpush1.msra.mxu0 0.0
    %1343 = vmatprep.subr.mxu0 0.0
    %1344 = vmatpush1.msra.mxu0 0.0
    %1345 = vmatprep.subr.mxu0 0.0
    %1346 = vmatpush1.msra.mxu0 0.0
    %1347 = vmatprep.subr.mxu0 0.0
    %1348 = vmatpush1.msra.mxu0 0.0
    %1349 = vmatprep.subr.mxu0 0.0
    %1350 = vmatpush1.msra.mxu0 0.0
    %1351 = vmatprep.subr.mxu0 0.0
    %1352 = vmatpush1.msra.mxu0 0.0
    %1353 = vmatprep.subr.mxu0 0.0
    %1354 = vmatpush1.msra.mxu0 0.0
    %1355 = vmatprep.subr.mxu0 0.0
    %1356 = vmatpush1.msra.mxu0 0.0
    %1357 = vmatprep.subr.mxu0 0.0
    %1358 = vmatpush1.msra.mxu0 0.0
    %1359 = vmatprep.mubr.f32.mxu0 0.0
    %v1360 = vand.u32 %v719, 4294901760
    %1361 = vmatmul.mubr.f32.gmra.mrb[0].mxu0 %v1360
    %v1362 = vpop.f32.mrb[0].mxu0
    %v1363 = vadd.f32 %v1276, %v1362
    %v1364 = vpop.f32.mrb[0].mxu0
    %1365 = vdwg.mxu0
    %v1366 = vadd.s32 %v67, 1
    %v1367 = vcvt.s32.f32 %v1366
    %v1368 = vrcp.pop %v1367
    %v1369 = vmul.f32 1.0, %v1368
    %v1370 = vmul.f32 %v716, %v1369
    %v1371 = vmul.f32 %v1363, %v1369
    %v1372 = vmul.f32 %v1370, %v1370
    %v1373 = vsub.f32 %v1371, %v1372
    %v1374 = vadd.f32 %v1373, 0.0001
    %v1375 = vrsqrt.pop %v1374
    %v1376 = vsub.f32 %v72, %v1370
    %v1377 = vmul.f32 %v1376, %v1375
    %1378 = vst [vmem:[#allocation9] sm:$0xff] %v1377
    %1380 = vrot.lane.b32.xlu0 %v716, 1
    %v1381 = vpop.permute.xlu0 %1380
    %vm1383 = vcmask 7168
    %1384 = vst.msk [vmem:[#allocation2] sm:$0xff] %vm1383, %v1381
    %1386 = vrot.lane.b32.xlu0 %v1363, 1
    %v1387 = vpop.permute.xlu0 %1386
    %1389 = vst.msk [vmem:[#allocation3] sm:$0xff] %vm1383, %v1387
    // Predicated region
    $region22: #{tpu_custom_call.1} parent=1 // pred_check
      _
    $region23: #{tpu_custom_call.1} parent=1 // pred_check_branch
      %1391 = sbr.rel (0) target = $region25
    $region24: #{tpu_custom_call.1} parent=1 // pred_region
      %s1393 = ssub.s32 128, 128
      %1394 = vsyncadd [#allocation6], %s1393
      %s1396 = sshll.u32 [#allocation9], 4
      %s1397 = int_to_ptr.vmem [resolvable:$true] %s1396
      %1399 = dma.vmem_to_hbm [thread:$0]  %s1397, 128, %s2, [#allocation6]
    $region25: #{tpu_custom_call.1} parent=1 // pred_fallthru
      _
    // Predicated region
    $region26: #{tpu_custom_call.1} parent=1 // pred_check
      _
    $region27: #{tpu_custom_call.1} parent=1 // pred_check_branch
      %1401 = sbr.rel (0) target = $region29
    $region28: #{tpu_custom_call.1} parent=1 // pred_region
      %1402 = dma.done [#allocation6], 128
    $region29: #{tpu_custom_call.1} parent=1 // pred_fallthru
      _
    %1403 = vsyncpa [#allocation5], 1
    %1404 = vsyncpa [#allocation8], 1
    %1405 = vsyncpa [#allocation6], 1

</llo_original>
